<compile_context>
chip_gen: v5e
topology: v5e:2x2
jax: 0.10.0
libtpu: 0.0.40
codegen_flags: <defaults>
</compile_context>

<pallas_src>
import math

import jax
import jax.numpy as jnp
from jax.experimental import pallas as pl
from jax.experimental.pallas import tpu as pltpu


def _copy_kernel(x_ref, o_ref):
    # Feature window already selected by the input BlockSpec -> pure tile copy.
    o_ref[...] = x_ref[...]


def _choose_row_tile(rows: int, block_width: int, dtype_bytes: int) -> int:
    """Row-tile height: ~3 MiB input block per grid step, >=2 row blocks when
    rows >= 64 (pipeline overlap + v7x megacore sharding)."""
    TARGET_BLOCK_BYTES = 3 * 1024 * 1024
    tr = TARGET_BLOCK_BYTES // max(block_width * dtype_bytes, 1)
    tr = max((tr // 32) * 32, 32)          # sublane-aligned for every dtype
    if rows >= 64:
        # Aim for >= 4 grid steps (never fewer than 2) along the row axis.
        cap = max(((rows // 4) // 32) * 32, 32)
        tr = min(tr, cap)
    return min(tr, rows)                   # full-extent block for tiny inputs


def _pallas_slice_last_dim(x2d: jax.Array, start: int, width: int) -> jax.Array:
    """Copy x2d[:, start:start+width] with start % 128 == 0, width % 128 == 0."""
    rows, _ = x2d.shape
    dtype_bytes = jnp.dtype(x2d.dtype).itemsize

    # Feature-block size: largest block dividing both width and start so the
    # window is expressible as whole BlockSpec blocks (multiple of 128 since
    # both start and width are).  For the half-split this is simply `width`.
    fb = math.gcd(width, start) if start else width
    lane_blocks = width // fb
    lane_off = start // fb

    tr = _choose_row_tile(rows, fb, dtype_bytes)
    grid = (pl.cdiv(rows, tr), lane_blocks)

    in_spec = pl.BlockSpec((tr, fb), lambda i, j: (i, lane_off + j))
    out_spec = pl.BlockSpec((tr, fb), lambda i, j: (i, j))

    kept_bytes = rows * width * dtype_bytes

    return pl.pallas_call(
        _copy_kernel,
        out_shape=jax.ShapeDtypeStruct((rows, width), x2d.dtype),
        grid=grid,
        in_specs=[in_spec],
        out_specs=out_spec,
        compiler_params=pltpu.CompilerParams(
            dimension_semantics=("parallel", "parallel"),
            vmem_limit_bytes=32 * 1024 * 1024),
        cost_estimate=pl.CostEstimate(
            flops=0,
            transcendentals=0,
            bytes_accessed=2 * kept_bytes),   # read kept cols + write them
    )(x2d)


class FeatureSlice:
    """JAX/Pallas port of the PyTorch FeatureSlice module (no parameters)."""

    def __init__(self, mode: str = 'both'):
        if mode not in ('both', 'emo', 'pkl'):
            raise ValueError("feature_slice must be 'both' | 'emo' | 'pkl'")
        self.mode = mode

    def __call__(self, x: jax.Array) -> jax.Array:
        if self.mode == 'both':
            return x  # identity: no kernel, no HBM traffic

        feat = x.shape[-1]
        half = feat // 2
        if self.mode == 'emo':
            start, width = 0, half
        else:  # 'pkl'
            start, width = half, feat - half

        lead = x.shape[:-1]
        rows = 1
        for d in lead:
            rows *= d

        # Degenerate / non-lane-aligned windows: a bare XLA slice avoids the
        # full-width read amplification and masked stores a Pallas fallback
        # would incur, and can fuse into the consumer.
        if (width == 0 or rows == 0
                or start % 128 != 0 or width % 128 != 0):
            return x[..., start:start + width]

        x2d = x.reshape(rows, feat)
        out2d = _pallas_slice_last_dim(x2d, start, width)
        return out2d.reshape(*lead, width)


if __name__ == "__main__":
    key = jax.random.PRNGKey(0)
    k1, k2, k3 = jax.random.split(key, 3)

    ok = True

    # Small module-consistent shape: batch=2, seq=8, hidden=32 ([emo || pkl]).
    x = jax.random.normal(k1, (2, 8, 32), dtype=jnp.float32)
    half = x.shape[-1] // 2

    # mode='both' -> identity (no kernel launched)
    y_both = FeatureSlice('both')(x)
    ok &= y_both.shape == x.shape
    ok &= bool(jnp.allclose(jax.block_until_ready(y_both), x))

    # mode='emo' / 'pkl' at width=16 -> lane-unaligned, XLA-slice path
    y_emo = jax.block_until_ready(FeatureSlice('emo')(x))
    y_pkl = jax.block_until_ready(FeatureSlice('pkl')(x))
    ok &= y_emo.shape == (2, 8, half) and y_pkl.shape == (2, 8, half)
    ok &= bool(jnp.allclose(y_emo, x[..., :half]))
    ok &= bool(jnp.allclose(y_pkl, x[..., half:]))

    # Lane-aligned feature width (256 -> halves of 128), rows = 64 -> Pallas
    # path with a row-tiled grid of >= 2 blocks.
    x_big = jax.random.normal(k2, (4, 16, 256), dtype=jnp.float32)
    y_emo_b = jax.block_until_ready(FeatureSlice('emo')(x_big))
    y_pkl_b = jax.block_until_ready(FeatureSlice('pkl')(x_big))
    ok &= y_emo_b.shape == (4, 16, 128) and y_pkl_b.shape == (4, 16, 128)
    ok &= bool(jnp.allclose(y_emo_b, x_big[..., :128]))
    ok &= bool(jnp.allclose(y_pkl_b, x_big[..., 128:]))

    # bf16, wider aligned feature dim (512 -> halves of 256), odd row count
    # exercises the partial last row block.
    x_bf = jax.random.normal(k3, (3, 20, 512), dtype=jnp.float32).astype(jnp.bfloat16)
    y_pkl_bf = jax.block_until_ready(FeatureSlice('pkl')(x_bf))
    ok &= y_pkl_bf.shape == (3, 20, 256)
    ok &= bool(jnp.array_equal(y_pkl_bf, x_bf[..., 256:]))

    if ok:
        print("KERNEL_OK")
    else:
        raise SystemExit("mismatch vs reference slicing")
</pallas_src>

<mosaic_0001>
module attributes {stable_mosaic.version = 11 : i64} {
  func.func @_copy_kernel(%arg0: i32, %arg1: i32, %arg2: memref<32x128xf32, #tpu.memory_space<vmem>>, %arg3: memref<32x128xf32, #tpu.memory_space<vmem>>) attributes {dimension_semantics = [#tpu.dimension_semantics<parallel>, #tpu.dimension_semantics<parallel>], iteration_bounds = array<i64: 2, 1>, scalar_prefetch = 0 : i64, scratch_operands = 0 : i64, tpu.core_type = #tpu.core_type<tc>, window_params = [{transform_indices = @transform_0, window_bounds = array<i64: 32, 128>}, {transform_indices = @transform_1, window_bounds = array<i64: 32, 128>}]} {
    %c0 = arith.constant 0 : index
    %c0_0 = arith.constant 0 : index
    %0 = vector.load %arg2[%c0, %c0_0] : memref<32x128xf32, #tpu.memory_space<vmem>>, vector<32x128xf32>
    %c0_1 = arith.constant 0 : index
    %c0_2 = arith.constant 0 : index
    %1 = vector.load %arg3[%c0_1, %c0_2] : memref<32x128xf32, #tpu.memory_space<vmem>>, vector<32x128xf32>
    tpu.vector_store %arg3[%c0_1, %c0_2], %0 {strides = array<i32>} : memref<32x128xf32, #tpu.memory_space<vmem>>, vector<32x128xf32>,
    return
  }
  func.func @transform_0(%arg0: i32, %arg1: i32) -> (i32, i32) {
    %c0_i32 = arith.constant 0 : i32
    %0 = arith.addi %c0_i32, %arg1 : i32
    %c0_i32_0 = arith.constant 0 : i32
    return %arg0, %0 : i32, i32
  }
  func.func @transform_1(%arg0: i32, %arg1: i32) -> (i32, i32) {
    %c0_i32 = arith.constant 0 : i32
    return %arg0, %arg1 : i32, i32
  }
}

</mosaic_0001>

<llo_original>
// kernel: tpu_custom_call.1
$region0: #{tpu_custom_call.1}
  #allocation0 [shape = 'u32[]', space=smem, size = 0x4, offset = 0x4, fixed_abs, tag = 'smem constant byte address 0x4 - core index']
  #allocation1 [shape = 'u32[72,128]{1,0:T(1,128)}', space=vmem, size = 0x9000, scoped, tag = 'internal scratch']
  %s0 = inlined_call_operand.hbm [shape: f32[64,256], index: 0, kind: input, shape index: {}]
  %s1 = inlined_call_operand.hbm [shape: f32[64,128], index: 1, kind: output, shape index: {}]
  %s2 = sld [smem:[#allocation0]]
  $region41: #{tpu_custom_call.1} parent=0
    _
  %s4 = ssub.s32 1, %s2
  %s5 = scalar_select 0, %s4, %s2
  $region1: #{tpu_custom_call.1} parent=0
    #allocation2 [shape = 'u8[32768]{0}', space=vmem, size = 0x8000, scoped, tag = 'input window, operand 0']
    #allocation3 [shape = 's32[2]{0}', space=sflag, size = 0x8, scoped, tag = 'scoped memory for tpu_custom_call.1']
    #allocation4 [shape = 's32[2]{0}', space=sflag, size = 0x8, scoped, tag = 'scoped memory for tpu_custom_call.1']
    #allocation5 [shape = 'u8[32768]{0}', space=vmem, size = 0x8000, scoped, tag = 'output window, operand 0']
    %6 = vsyncpa [#allocation3], 0
    %s7 = scalar_lea.sflag [#allocation3], 1
    %8 = vsyncpa %s7, 0
    %9 = vsyncpa [#allocation4], 0
    %s10 = scalar_lea.sflag [#allocation4], 1
    %11 = vsyncpa %s10, 0
    loop: start=0, step=1, limit=4
    $region2: #{tpu_custom_call.1} parent=1 // loop_pre_header
      _
    $region3: #{tpu_custom_call.1} parent=1 // loop_header
      %s13 = sphi 0, %s17
      %p14 = scmp.ge.s32.totalorder %s13, 4
      %s20 = sphi 0, %s32
      %s21 = sphi 0, %s28
      %s22 = sphi 0, %s20
      %s23 = sphi 0, %s21
      %s24 = sphi 0, %s22
      %s25 = sphi 0, %s23
      %s37 = sphi 0, %s39
      %s40 = sphi 0, %s37
      %s41 = sphi 0, %s40
      %s57 = sphi 0, %s41
      %s65 = sphi 0, %s67
      %s68 = sphi 0, %s65
      %s69 = sphi 0, %s68
      %s85 = sphi 0, %s69
    $region4: #{tpu_custom_call.1} parent=1 // loop_header_branch
      %16 = sbr.rel (%p14) target = $region8
    $region5: #{tpu_custom_call.1} parent=1 // loop_body
      %s18 = ssub.s32 %s13, 1
      %s19 = ssub.s32 %s13, 2
      %s26 = sadd.s32 1, %s21
      %p27 = scmp.ge.s32.totalorder %s26, 1
      %s28 = scalar_select %p27, 0, %s26
      %s29 = sadd.s32 1, %s20
      %s30 = scalar_select %p27, %s29, %s20
      %p31 = scmp.ge.s32.totalorder %s30, 2
      %s32 = scalar_select %p31, 0, %s30
      %s33 = ssub.s32 %s20, %s32
      %s34 = ssub.s32 %s21, %s28
      %s35 = sor.u32 %s33, %s34
      %p36 = scmp.eq.s32.totalorder %s35, 0
      %s38 = sadd.s32 %s37, 1
      %s39 = scalar_select %p36, %s37, %s38
      %p42 = pneg %p36
      %p43 = scmp.eq.s32.totalorder %s13, 1
      %p44 = por %p42, %p43
      %p45 = scmp.ne.s32.totalorder %s37, %s40
      %p46 = scmp.eq.s32.totalorder %s13, 0
      %p47 = por %p45, %p46
      %p48 = scmp.ne.s32.totalorder %s37, %s40
      %p49 = scmp.eq.s32.totalorder %s18, 1
      %p50 = por %p48, %p49
      %p51 = scmp.ne.s32.totalorder %s40, %s41
      %p52 = scmp.eq.s32.totalorder %s18, 0
      %p53 = por %p51, %p52
      %p54 = scmp.ne.s32.totalorder %s40, %s41
      %p55 = scmp.eq.s32.totalorder %s19, 1
      %p56 = por %p54, %p55
      %p58 = scmp.ne.s32.totalorder %s41, %s57
      %p59 = scmp.eq.s32.totalorder %s19, 0
      %p60 = por %p58, %p59
      %s61 = ssub.s32 %s20, %s32
      %s62 = ssub.s32 %s21, %s28
      %s63 = sor.u32 %s61, %s62
      %p64 = scmp.eq.s32.totalorder %s63, 0
      %s66 = sadd.s32 %s65, 1
      %s67 = scalar_select %p64, %s65, %s66
      %p70 = pneg %p64
      %p71 = scmp.eq.s32.totalorder %s13, 1
      %p72 = por %p70, %p71
      %p73 = scmp.ne.s32.totalorder %s65, %s68
      %p74 = scmp.eq.s32.totalorder %s13, 0
      %p75 = por %p73, %p74
      %p76 = scmp.ne.s32.totalorder %s65, %s68
      %p77 = scmp.eq.s32.totalorder %s18, 1
      %p78 = por %p76, %p77
      %p79 = scmp.ne.s32.totalorder %s68, %s69
      %p80 = scmp.eq.s32.totalorder %s18, 0
      %p81 = por %p79, %p80
      %p82 = scmp.ne.s32.totalorder %s68, %s69
      %p83 = scmp.eq.s32.totalorder %s19, 1
      %p84 = por %p82, %p83
      %p86 = scmp.ne.s32.totalorder %s69, %s85
      %p87 = scmp.eq.s32.totalorder %s19, 0
      %p88 = por %p86, %p87
      %p89 = scmp.le.s32.totalorder 1, %s13
      %p90 = scmp.lt.s32.totalorder %s13, 3
      %p91 = pnand %p89, %p90
      %p92 = pneg %p91
      // Predicated region
      $region9: #{tpu_custom_call.1} parent=5 // pred_check
        _
      $region10: #{tpu_custom_call.1} parent=5 // pred_check_branch
        %94 = sbr.rel (%p91) target = $region12
      $region11: #{tpu_custom_call.1} parent=5 // pred_region
        %s95 = ssub.s32 %s13, 1
      $region12: #{tpu_custom_call.1} parent=5 // pred_fallthru
        _
      %p96 = scmp.lt.s32.totalorder %s13, 2
      // Predicated region
      $region13: #{tpu_custom_call.1} parent=5 // pred_check
        %p97 = pneg %p96
      $region14: #{tpu_custom_call.1} parent=5 // pred_check_branch
        %99 = sbr.rel (%p97) target = $region16
      $region15: #{tpu_custom_call.1} parent=5 // pred_region
        // Predicated region
        $region17: #{tpu_custom_call.1} parent=15 // pred_check
          %p100 = pneg %p47
        $region18: #{tpu_custom_call.1} parent=15 // pred_check_branch
          %102 = sbr.rel (%p100) target = $region20
        $region19: #{tpu_custom_call.1} parent=15 // pred_region
          %s103 = sand.u32 %s37, 1
          %s104 = scalar_lea.sflag [#allocation3], %s103
          %s105 = sand.u32 %s37, 1
          %s106 = smul.addr %s105, 32
          %s107 = scalar_lea.vmem [#allocation2], %s106
          %s108 = smul.u32 4, %s20
          %110 = vsyncadd %s104, 0
          %s111 = smul.addr %s108, 2
          %s112 = sadd.s32 %s21, %s111
          %s113 = smul.addr %s112, 8
          %s114 = scalar_lea.hbm %s0, %s113
          %s115 = sshll.u32 %s114, 4
          %s116 = int_to_ptr.hbm [resolvable:$true] %s115
          %s117 = sshll.u32 %s107, 4
          %s118 = int_to_ptr.vmem [resolvable:$true] %s117
          %123 = dma.hbm_to_vmem [thread:$0]  %s116, 512, %s118, %s104, 256, 128, 8
        $region20: #{tpu_custom_call.1} parent=15 // pred_fallthru
          _
      $region16: #{tpu_custom_call.1} parent=5 // pred_fallthru
        _
      %p124 = scmp.le.s32.totalorder 1, %s13
      %p125 = scmp.lt.s32.totalorder %s13, 3
      %p126 = pnand %p124, %p125
      %p127 = pneg %p126
      // Predicated region
      $region21: #{tpu_custom_call.1} parent=5 // pred_check
        _
      $region22: #{tpu_custom_call.1} parent=5 // pred_check_branch
        %129 = sbr.rel (%p126) target = $region24
      $region23: #{tpu_custom_call.1} parent=5 // pred_region
        %s130 = ssub.s32 %s13, 1
        %s131 = sand.u32 %s40, 1
        %s132 = scalar_lea.sflag [#allocation3], %s131
        %s133 = sand.u32 %s40, 1
        %s134 = smul.addr %s133, 32
        %s135 = scalar_lea.vmem [#allocation2], %s134
        // Predicated region
        $region25: #{tpu_custom_call.1} parent=23 // pred_check
          %p136 = pneg %p53
        $region26: #{tpu_custom_call.1} parent=23 // pred_check_branch
          %138 = sbr.rel (%p136) target = $region28
        $region27: #{tpu_custom_call.1} parent=23 // pred_region
          %140 = dma.done %s132, 512
        $region28: #{tpu_custom_call.1} parent=23 // pred_fallthru
          _
        %s141 = sand.u32 %s40, 1
        %s142 = scalar_lea.sflag [#allocation3], %s141
        %s143 = sand.u32 %s40, 1
        %s144 = smul.addr %s143, 32
        %s145 = scalar_lea.vmem [#allocation2], %s144
        %p146 = pneg %p53
        %p147 = pneg %p50
        %p148 = pneg %p81
        %p149 = pneg %p78
        %s150 = sand.u32 %s68, 1
        %s151 = scalar_lea.sflag [#allocation4], %s150
        %s152 = sand.u32 %s68, 1
        %s153 = smul.addr %s152, 32
        %s154 = scalar_lea.vmem [#allocation5], %s153
        %s155 = smul.u32 4, %s22
        %s156 = smul.u32 4, %s22
        %v157 = vld [vmem:[%s135] sm:$0xff]
        %v158 = vld [vmem:[%s135 + $0x8] sm:$0xff]
        %v159 = vld [vmem:[%s135 + $0x10] sm:$0xff]
        %v160 = vld [vmem:[%s135 + $0x18] sm:$0xff]
        %161 = vst [vmem:[%s154] sm:$0xff] %v157
        %162 = vst [vmem:[%s154 + $0x8] sm:$0xff] %v158
        %163 = vst [vmem:[%s154 + $0x10] sm:$0xff] %v159
        %164 = vst [vmem:[%s154 + $0x18] sm:$0xff] %v160
        %s165 = sand.u32 %s68, 1
        %s166 = scalar_lea.sflag [#allocation4], %s165
        %s167 = sand.u32 %s68, 1
        %s168 = smul.addr %s167, 32
        %s169 = scalar_lea.vmem [#allocation5], %s168
        // Predicated region
        $region29: #{tpu_custom_call.1} parent=23 // pred_check
          %p170 = pneg %p78
        $region30: #{tpu_custom_call.1} parent=23 // pred_check_branch
          %172 = sbr.rel (%p170) target = $region32
        $region31: #{tpu_custom_call.1} parent=23 // pred_region
          %s173 = smul.u32 4, %s22
          %175 = vsyncadd %s166, 0
          %s176 = sadd.s32 %s23, %s173
          %s177 = smul.addr %s176, 8
          %s178 = scalar_lea.hbm %s1, %s177
          %s179 = sshll.u32 %s169, 4
          %s180 = int_to_ptr.vmem [resolvable:$true] %s179
          %s181 = sshll.u32 %s178, 4
          %s182 = int_to_ptr.hbm [resolvable:$true] %s181
          %187 = dma.vmem_to_hbm [thread:$0]  %s180, 512, %s182, %s166, 128, 128, 8
        $region32: #{tpu_custom_call.1} parent=23 // pred_fallthru
          _
      $region24: #{tpu_custom_call.1} parent=5 // pred_fallthru
        _
      %p188 = scmp.le.s32.totalorder 2, %s13
      // Predicated region
      $region33: #{tpu_custom_call.1} parent=5 // pred_check
        %p189 = pneg %p188
      $region34: #{tpu_custom_call.1} parent=5 // pred_check_branch
        %191 = sbr.rel (%p189) target = $region36
      $region35: #{tpu_custom_call.1} parent=5 // pred_region
        %s192 = ssub.s32 %s13, 2
        // Predicated region
        $region37: #{tpu_custom_call.1} parent=35 // pred_check
          %p193 = pneg %p84
        $region38: #{tpu_custom_call.1} parent=35 // pred_check_branch
          %195 = sbr.rel (%p193) target = $region40
        $region39: #{tpu_custom_call.1} parent=35 // pred_region
          %s196 = sand.u32 %s69, 1
          %s197 = scalar_lea.sflag [#allocation4], %s196
          %s198 = sand.u32 %s69, 1
          %s199 = smul.addr %s198, 32
          %s200 = scalar_lea.vmem [#allocation5], %s199
          %202 = dma.done %s197, 512
        $region40: #{tpu_custom_call.1} parent=35 // pred_fallthru
          _
      $region36: #{tpu_custom_call.1} parent=5 // pred_fallthru
        _
    $region6: #{tpu_custom_call.1} parent=1 // loop_footer
      %s17 = sadd.s32 1, %s13
    $region7: #{tpu_custom_call.1} parent=1 // loop_footer_branch
      %12 = sbr.rel target = $region3
    $region8: #{tpu_custom_call.1} parent=1 // loop_exit
      _
    %203 = vsyncpa [#allocation3], 1
    %s204 = scalar_lea.sflag [#allocation3], 1
    %205 = vsyncpa %s204, 1
    %206 = vsyncpa [#allocation4], 1
    %s207 = scalar_lea.sflag [#allocation4], 1
    %208 = vsyncpa %s207, 1

</llo_original>
